<compile_context>
chip_gen: v6e
topology: v6e:2x2x1
jax: 0.10.0
libtpu: 0.0.40
codegen_flags: <defaults>
</compile_context>

<pallas_src>
import jax
import jax.numpy as jnp
from jax.experimental import pallas as pl
from jax.experimental.pallas import tpu as pltpu

NUM_LAYERS = 4
NEG_SLOPE = 0.2

LANES = 1024              # lane-dense last dim (multiple of 128)
MAX_TILE_ROWS = 1024      # 1024 x 1024 f32 = 4 MiB tile (v6e/v7x sweet spot)
MIN_GRID_STEPS = 4        # keep >=4 grid steps so v7x can use both TCs
VMEM_LIMIT_BYTES = 40 << 20   # 16 MiB of double buffers + headroom, OK on all gens


def _rc_kernel(w_ref, b_ref, x_ref, o_ref):
    # w_ref, b_ref: (NUM_LAYERS,) f32 scalars in SMEM.
    # x_ref, o_ref: (tile_rows, LANES) f32 tiles in VMEM.
    # Hoist all scalar SMEM reads off the per-stage critical path.
    ws = [w_ref[i] for i in range(NUM_LAYERS)]
    bs = [b_ref[i] for i in range(NUM_LAYERS)]

    y = x_ref[...].astype(jnp.float32)
    for w, b in zip(ws, bs):                 # static, fully unrolled
        y = y * w + b
        y = jnp.maximum(y, NEG_SLOPE * y)    # LeakyReLU(0.2), slope < 1
    o_ref[...] = y.astype(o_ref.dtype)


def _affine_leaky_chain(y, w, b):
    """Plain-jnp version of the 4-layer chain (used for the tiny flat tail)."""
    y = y.astype(jnp.float32)
    for i in range(NUM_LAYERS):
        y = y * w[i] + b[i]
        y = jnp.maximum(y, NEG_SLOPE * y)
    return y


def _ceil_to(x, m):
    return -(-x // m) * m


def rc_contrast_augmentation(x, weights, biases):
    """x: (N, C=1, D, H, W) float32. weights/biases: (NUM_LAYERS,) float32."""
    orig_shape = x.shape
    orig_dtype = x.dtype
    total = x.size
    flat = x.reshape(-1)

    main_len = (total // LANES) * LANES
    if main_len == 0:
        # Tiny volume (< 1024 elements): not worth a kernel launch.
        tail = _affine_leaky_chain(flat, weights, biases).astype(orig_dtype)
        return tail.reshape(orig_shape)

    rows = main_len // LANES
    if rows <= 8:
        tile_rows = rows            # full-dim block (allowed even if not %8)
    else:
        # >= MIN_GRID_STEPS grid steps, capped at a 4 MiB tile, %8 rows.
        tile_rows = min(MAX_TILE_ROWS,
                        _ceil_to(pl.cdiv(rows, MIN_GRID_STEPS), 8))
    grid = (pl.cdiv(rows, tile_rows),)      # ragged last block handled by Pallas

    x2d = flat[:main_len].reshape(rows, LANES)

    out2d = pl.pallas_call(
        _rc_kernel,
        out_shape=jax.ShapeDtypeStruct((rows, LANES), orig_dtype),
        grid=grid,
        in_specs=[
            pl.BlockSpec(memory_space=pltpu.MemorySpace.SMEM),      # weights
            pl.BlockSpec(memory_space=pltpu.MemorySpace.SMEM),      # biases
            pl.BlockSpec((tile_rows, LANES), lambda i: (i, 0)),     # x tile
        ],
        out_specs=pl.BlockSpec((tile_rows, LANES), lambda i: (i, 0)),
        compiler_params=pltpu.CompilerParams(
            dimension_semantics=("parallel",),
            vmem_limit_bytes=VMEM_LIMIT_BYTES,
        ),
    )(weights, biases, x2d)

    out_main = out2d.reshape(-1)

    if main_len == total:
        # Aligned case: no pad, no slice, no concat.
        return out_main.reshape(orig_shape)

    # Ragged case: < 1024 trailing elements done in plain jnp, then stitched.
    tail_out = _affine_leaky_chain(flat[main_len:], weights, biases)
    tail_out = tail_out.astype(orig_dtype)
    return jnp.concatenate([out_main, tail_out]).reshape(orig_shape)


def make_params(key):
    """Deterministic stand-in for reset_parameters():
       weight ~ U(0, 2) - 1        -> U(-1, 1)
       bias   ~ U(0, 0.01) - 0.005 -> U(-0.005, 0.005)
    """
    kw, kb = jax.random.split(key)
    min_val, max_val = 0.0, 2.0
    min_b, max_b = 0.0, 0.01
    w = jax.random.uniform(kw, (NUM_LAYERS,), jnp.float32, min_val, max_val)
    w = w - (max_val - min_val) / 2.0
    b = jax.random.uniform(kb, (NUM_LAYERS,), jnp.float32, min_b, max_b)
    b = b - (max_b - min_b) / 2.0
    return w, b


def reference(x, w, b):
    y = x.astype(jnp.float32)
    for i in range(NUM_LAYERS):
        y = y * w[i] + b[i]
        y = jnp.where(y >= 0.0, y, NEG_SLOPE * y)
    return y.astype(x.dtype)


if __name__ == "__main__":
    key = jax.random.PRNGKey(0)
    kx1, kx2, kx3, kp = jax.random.split(key, 4)
    w, b = make_params(kp)

    rc_fn = jax.jit(rc_contrast_augmentation)

    # Case 1: non-lane-aligned volume -> kernel on main slab + jnp tail.
    x_ragged = jax.random.normal(kx1, (2, 1, 9, 11, 13), dtype=jnp.float32)
    out = jax.block_until_ready(rc_fn(x_ragged, w, b))
    assert out.shape == x_ragged.shape
    assert jnp.allclose(out, reference(x_ragged, w, b), atol=1e-5, rtol=1e-5)

    # Case 2: aligned volume -> ragged-free multi-step pipelined grid (4 steps).
    x_aligned = jax.random.normal(kx2, (2, 1, 32, 32, 32), dtype=jnp.float32)
    out = jax.block_until_ready(rc_fn(x_aligned, w, b))
    assert out.shape == x_aligned.shape
    assert jnp.allclose(out, reference(x_aligned, w, b), atol=1e-5, rtol=1e-5)

    # Case 3: tiny volume (< 1024 elements) -> pure jnp fallback path.
    x_tiny = jax.random.normal(kx3, (1, 1, 3, 4, 5), dtype=jnp.float32)
    out = jax.block_until_ready(rc_fn(x_tiny, w, b))
    assert out.shape == x_tiny.shape
    assert jnp.allclose(out, reference(x_tiny, w, b), atol=1e-5, rtol=1e-5)

    print("KERNEL_OK")
</pallas_src>

<mosaic_0001>
module attributes {stable_mosaic.version = 11 : i64} {
  func.func @_rc_kernel(%arg0: i32, %arg1: memref<4xf32, #tpu.memory_space<smem>>, %arg2: memref<4xf32, #tpu.memory_space<smem>>, %arg3: memref<2x1024xf32, #tpu.memory_space<vmem>>, %arg4: memref<2x1024xf32, #tpu.memory_space<vmem>>) attributes {dimension_semantics = [#tpu.dimension_semantics<parallel>], iteration_bounds = array<i64: 1>, scalar_prefetch = 0 : i64, scratch_operands = 0 : i64, tpu.core_type = #tpu.core_type<tc>, window_params = [{transform_indices = @transform_0, window_bounds = array<i64: 4>}, {transform_indices = @transform_1, window_bounds = array<i64: 4>}, {transform_indices = @transform_2, window_bounds = array<i64: 2, 1024>}, {transform_indices = @transform_3, window_bounds = array<i64: 2, 1024>}]} {
    %c0 = arith.constant 0 : index
    %0 = memref.load %arg1[%c0] : memref<4xf32, #tpu.memory_space<smem>>
    %c1 = arith.constant 1 : index
    %1 = memref.load %arg1[%c1] : memref<4xf32, #tpu.memory_space<smem>>
    %c2 = arith.constant 2 : index
    %2 = memref.load %arg1[%c2] : memref<4xf32, #tpu.memory_space<smem>>
    %c3 = arith.constant 3 : index
    %3 = memref.load %arg1[%c3] : memref<4xf32, #tpu.memory_space<smem>>
    %c0_0 = arith.constant 0 : index
    %4 = memref.load %arg2[%c0_0] : memref<4xf32, #tpu.memory_space<smem>>
    %c1_1 = arith.constant 1 : index
    %5 = memref.load %arg2[%c1_1] : memref<4xf32, #tpu.memory_space<smem>>
    %c2_2 = arith.constant 2 : index
    %6 = memref.load %arg2[%c2_2] : memref<4xf32, #tpu.memory_space<smem>>
    %c3_3 = arith.constant 3 : index
    %7 = memref.load %arg2[%c3_3] : memref<4xf32, #tpu.memory_space<smem>>
    %c0_4 = arith.constant 0 : index
    %c0_5 = arith.constant 0 : index
    %8 = vector.load %arg3[%c0_4, %c0_5] : memref<2x1024xf32, #tpu.memory_space<vmem>>, vector<2x1024xf32>
    %9 = vector.broadcast %0 : f32 to vector<2x1024xf32>
    %10 = arith.mulf %8, %9 : vector<2x1024xf32>
    %11 = vector.broadcast %4 : f32 to vector<2x1024xf32>
    %12 = arith.addf %10, %11 : vector<2x1024xf32>
    %cst = arith.constant 2.000000e-01 : f32
    %13 = vector.broadcast %cst : f32 to vector<2x1024xf32>
    %14 = arith.mulf %13, %12 : vector<2x1024xf32>
    %15 = arith.maximumf %12, %14 : vector<2x1024xf32>
    %16 = vector.broadcast %1 : f32 to vector<2x1024xf32>
    %17 = arith.mulf %15, %16 : vector<2x1024xf32>
    %18 = vector.broadcast %5 : f32 to vector<2x1024xf32>
    %19 = arith.addf %17, %18 : vector<2x1024xf32>
    %cst_6 = arith.constant 2.000000e-01 : f32
    %20 = vector.broadcast %cst_6 : f32 to vector<2x1024xf32>
    %21 = arith.mulf %20, %19 : vector<2x1024xf32>
    %22 = arith.maximumf %19, %21 : vector<2x1024xf32>
    %23 = vector.broadcast %2 : f32 to vector<2x1024xf32>
    %24 = arith.mulf %22, %23 : vector<2x1024xf32>
    %25 = vector.broadcast %6 : f32 to vector<2x1024xf32>
    %26 = arith.addf %24, %25 : vector<2x1024xf32>
    %cst_7 = arith.constant 2.000000e-01 : f32
    %27 = vector.broadcast %cst_7 : f32 to vector<2x1024xf32>
    %28 = arith.mulf %27, %26 : vector<2x1024xf32>
    %29 = arith.maximumf %26, %28 : vector<2x1024xf32>
    %30 = vector.broadcast %3 : f32 to vector<2x1024xf32>
    %31 = arith.mulf %29, %30 : vector<2x1024xf32>
    %32 = vector.broadcast %7 : f32 to vector<2x1024xf32>
    %33 = arith.addf %31, %32 : vector<2x1024xf32>
    %cst_8 = arith.constant 2.000000e-01 : f32
    %34 = vector.broadcast %cst_8 : f32 to vector<2x1024xf32>
    %35 = arith.mulf %34, %33 : vector<2x1024xf32>
    %36 = arith.maximumf %33, %35 : vector<2x1024xf32>
    %c0_9 = arith.constant 0 : index
    %c0_10 = arith.constant 0 : index
    %37 = vector.load %arg4[%c0_9, %c0_10] : memref<2x1024xf32, #tpu.memory_space<vmem>>, vector<2x1024xf32>
    tpu.vector_store %arg4[%c0_9, %c0_10], %36 {strides = array<i32>} : memref<2x1024xf32, #tpu.memory_space<vmem>>, vector<2x1024xf32>,
    return
  }
  func.func @transform_0(%arg0: i32) -> i32 {
    %c0_i32 = arith.constant 0 : i32
    %c0_i32_0 = arith.constant 0 : i32
    return %c0_i32 : i32
  }
  func.func @transform_1(%arg0: i32) -> i32 {
    %c0_i32 = arith.constant 0 : i32
    %c0_i32_0 = arith.constant 0 : i32
    return %c0_i32 : i32
  }
  func.func @transform_2(%arg0: i32) -> (i32, i32) {
    %c0_i32 = arith.constant 0 : i32
    %c0_i32_0 = arith.constant 0 : i32
    return %arg0, %c0_i32 : i32, i32
  }
  func.func @transform_3(%arg0: i32) -> (i32, i32) {
    %c0_i32 = arith.constant 0 : i32
    %c0_i32_0 = arith.constant 0 : i32
    return %arg0, %c0_i32 : i32, i32
  }
}

</mosaic_0001>

<llo_original>
// kernel: rc_contrast_augmentation.1
$region0: #{rc_contrast_augmentation.1}
  #allocation0 [shape = 'u32[]', space=smem, size = 0x4, offset = 0x4, fixed_abs, tag = 'smem constant byte address 0x4 - core index']
  #allocation1 [shape = 'u32[144,128]{1,0:T(1,128)}', space=vmem, size = 0x12000, scoped, tag = 'internal scratch']
  %s0 = inlined_call_operand.vmem [shape: f32[4], index: 0, kind: input, shape index: {}]
  %s1 = inlined_call_operand.vmem [shape: f32[4], index: 1, kind: input, shape index: {}]
  %s2 = inlined_call_operand.vmem [shape: f32[2,1024], index: 2, kind: input, shape index: {}]
  %s3 = inlined_call_operand.vmem [shape: f32[2,1024], index: 3, kind: output, shape index: {}]
  %s4 = sld [smem:[#allocation0]]
  $region30: #{rc_contrast_augmentation.1} parent=0
    _
  %s6 = ssub.s32 1, %s4
  %s7 = scalar_select 0, %s6, %s4
  $region1: #{rc_contrast_augmentation.1} parent=0
    #allocation2 [shape = 'u8[512]{0}', space=smem, size = 0x200, scoped, tag = 'input window, operand 0, single buffered']
    #allocation3 [shape = 's32[1]{0}', space=sflag, size = 0x4, scoped, tag = 'scoped memory for rc_contrast_augmentation.1']
    #allocation4 [shape = 'u8[512]{0}', space=smem, size = 0x200, scoped, tag = 'input window, operand 1, single buffered']
    #allocation5 [shape = 's32[1]{0}', space=sflag, size = 0x4, scoped, tag = 'scoped memory for rc_contrast_augmentation.1']
    %8 = vsyncpa [#allocation3], 0
    %9 = vsyncpa [#allocation5], 0
    // Predicated region
    $region2: #{rc_contrast_augmentation.1} parent=1 // pred_check
      _
    $region3: #{rc_contrast_augmentation.1} parent=1 // pred_check_branch
      %11 = sbr.rel (0) target = $region5
    $region4: #{rc_contrast_augmentation.1} parent=1 // pred_region
      %s13 = ssub.s32 16, 16
      %14 = vsyncadd [#allocation3], %s13
      %s16 = sshll.u32 %s0, 4
      %s17 = int_to_ptr.vmem [resolvable:$true] %s16
      %19 = dma.vmem_to_smem %s17, 16, [#allocation2], [#allocation3]
    $region5: #{rc_contrast_augmentation.1} parent=1 // pred_fallthru
      _
    // Predicated region
    $region6: #{rc_contrast_augmentation.1} parent=1 // pred_check
      _
    $region7: #{rc_contrast_augmentation.1} parent=1 // pred_check_branch
      %21 = sbr.rel (0) target = $region9
    $region8: #{rc_contrast_augmentation.1} parent=1 // pred_region
      %s23 = ssub.s32 16, 16
      %24 = vsyncadd [#allocation5], %s23
      %s26 = sshll.u32 %s1, 4
      %s27 = int_to_ptr.vmem [resolvable:$true] %s26
      %29 = dma.vmem_to_smem %s27, 16, [#allocation4], [#allocation5]
    $region9: #{rc_contrast_augmentation.1} parent=1 // pred_fallthru
      _
    // Predicated region
    $region10: #{rc_contrast_augmentation.1} parent=1 // pred_check
      _
    $region11: #{rc_contrast_augmentation.1} parent=1 // pred_check_branch
      %31 = sbr.rel (0) target = $region13
    $region12: #{rc_contrast_augmentation.1} parent=1 // pred_region
      _
    $region13: #{rc_contrast_augmentation.1} parent=1 // pred_fallthru
      _
    // Predicated region
    $region14: #{rc_contrast_augmentation.1} parent=1 // pred_check
      _
    $region15: #{rc_contrast_augmentation.1} parent=1 // pred_check_branch
      %33 = sbr.rel (0) target = $region17
    $region16: #{rc_contrast_augmentation.1} parent=1 // pred_region
      %34 = dma.done [#allocation3], 16
    $region17: #{rc_contrast_augmentation.1} parent=1 // pred_fallthru
      _
    // Predicated region
    $region18: #{rc_contrast_augmentation.1} parent=1 // pred_check
      _
    $region19: #{rc_contrast_augmentation.1} parent=1 // pred_check_branch
      %36 = sbr.rel (0) target = $region21
    $region20: #{rc_contrast_augmentation.1} parent=1 // pred_region
      %37 = dma.done [#allocation5], 16
    $region21: #{rc_contrast_augmentation.1} parent=1 // pred_fallthru
      _
    %38 = sfence
    %s39 = sld [smem:[#allocation2]]
    %s40 = sld [smem:[#allocation2 + $0x1]]
    %s41 = sld [smem:[#allocation2 + $0x2]]
    %s42 = sld [smem:[#allocation2 + $0x3]]
    %s43 = sld [smem:[#allocation4]]
    %s44 = sld [smem:[#allocation4 + $0x1]]
    %s45 = sld [smem:[#allocation4 + $0x2]]
    %s46 = sld [smem:[#allocation4 + $0x3]]
    %v47 = vld [vmem:[%s2] sm:$0xff]
    %v48 = vld [vmem:[%s2 + $0x8] sm:$0xff]
    %v49 = vstv %s39
    %v50 = vmul.f32 %v47, %v49
    %v51 = vmul.f32 %v48, %v49
    %v52 = vstv %s43
    %v53 = vadd.f32 %v50, %v52
    %v54 = vadd.f32 %v51, %v52
    %v55 = vmul.f32 %v53, 0.2
    %v56 = vmul.f32 %v54, 0.2
    %v57 = vmax.f32 %v53, %v55
    %v58 = vmax.f32 %v54, %v56
    %v59 = vstv %s40
    %v60 = vmul.f32 %v57, %v59
    %v61 = vmul.f32 %v58, %v59
    %v62 = vstv %s44
    %v63 = vadd.f32 %v60, %v62
    %v64 = vadd.f32 %v61, %v62
    %v65 = vmul.f32 %v63, 0.2
    %v66 = vmul.f32 %v64, 0.2
    %v67 = vmax.f32 %v63, %v65
    %v68 = vmax.f32 %v64, %v66
    %v69 = vstv %s41
    %v70 = vmul.f32 %v67, %v69
    %v71 = vmul.f32 %v68, %v69
    %v72 = vstv %s45
    %v73 = vadd.f32 %v70, %v72
    %v74 = vadd.f32 %v71, %v72
    %v75 = vmul.f32 %v73, 0.2
    %v76 = vmul.f32 %v74, 0.2
    %v77 = vmax.f32 %v73, %v75
    %v78 = vmax.f32 %v74, %v76
    %v79 = vstv %s42
    %v80 = vmul.f32 %v77, %v79
    %v81 = vmul.f32 %v78, %v79
    %v82 = vstv %s46
    %v83 = vadd.f32 %v80, %v82
    %v84 = vadd.f32 %v81, %v82
    %v85 = vmul.f32 %v83, 0.2
    %v86 = vmul.f32 %v84, 0.2
    %v87 = vmax.f32 %v83, %v85
    %v88 = vmax.f32 %v84, %v86
    %89 = vst [vmem:[%s3] sm:$0xff] %v87
    %90 = vst [vmem:[%s3 + $0x8] sm:$0xff] %v88
    // Predicated region
    $region22: #{rc_contrast_augmentation.1} parent=1 // pred_check
      _
    $region23: #{rc_contrast_augmentation.1} parent=1 // pred_check_branch
      %92 = sbr.rel (0) target = $region25
    $region24: #{rc_contrast_augmentation.1} parent=1 // pred_region
      _
    $region25: #{rc_contrast_augmentation.1} parent=1 // pred_fallthru
      _
    // Predicated region
    $region26: #{rc_contrast_augmentation.1} parent=1 // pred_check
      _
    $region27: #{rc_contrast_augmentation.1} parent=1 // pred_check_branch
      %94 = sbr.rel (0) target = $region29
    $region28: #{rc_contrast_augmentation.1} parent=1 // pred_region
      _
    $region29: #{rc_contrast_augmentation.1} parent=1 // pred_fallthru
      _
    %95 = vsyncpa [#allocation3], 1
    %96 = vsyncpa [#allocation5], 1

</llo_original>
